<compile_context>
chip_gen: v7x
topology: tpu7x:2x2x1
jax: 0.10.0
libtpu: 0.0.40
codegen_flags: <defaults>
</compile_context>

<pallas_src>
import math

import jax
import jax.numpy as jnp
from jax.experimental import pallas as pl
from jax.experimental.pallas import tpu as pltpu

C_IN = 32          # fixed by the module (Conv2d(32, ...))
C_OUT = 6          # 1 (score) + 4 (loc) + 1 (angle), fused into one matmul
SCOPE = 512.0
_HALF_PI = math.pi / 2.0


def _make_output_kernel(nb):
    """Kernel processing `nb` batch items x one spatial tile per grid step."""

    def kernel(x_ref, w_ref, b_ref, scale_ref, off_ref, score_ref, geo_ref):
        # x_ref:     (nb, 32, TM)
        # w_ref:     (6, 32)    b_ref / scale_ref / off_ref: (6, 1)
        # score_ref: (nb, 1, TM)   geo_ref: (nb, 5, TM)   -- all lane-dense
        w = w_ref[...]
        b = b_ref[...]
        scale = scale_ref[...]
        off = off_ref[...]
        for i in range(nb):                                  # small static unroll
            y = jnp.dot(w, x_ref[i], preferred_element_type=jnp.float32) + b
            # sigmoid: exp on EUP, approx reciprocal also on EUP (free slot)
            s = pl.reciprocal(1.0 + jnp.exp(-y), approx=True)
            g = s * scale + off                              # fused affine (6, TM)
            score_ref[i] = g[0:1, :]                         # score
            geo_ref[i] = g[1:6, :]                           # [loc*scope, (ang-.5)*pi/2]

    return kernel


def output_forward(x_nchw, w, b, *, scope=SCOPE, tile_m=16384, min_steps=4):
    """Pallas implementation of east_resnet50.Output.forward.

    x_nchw: (N, 32, H, W) float32
    w:      (6, 32) fused 1x1-conv weights (rows: [score, loc0..loc3, angle])
    b:      (6,)    fused biases
    returns (score (N,1,H,W), geo (N,5,H,W))
    """
    N, C, H, W = x_nchw.shape
    assert C == C_IN
    M = H * W
    x = jnp.asarray(x_nchw, jnp.float32).reshape(N, C_IN, M)   # free, contiguous

    if M <= tile_m:
        # Small feature map: full spatial extent per step, fold batch items so
        # each step moves a decent chunk, but keep >= min(N, min_steps) steps
        # (megacore sharding on v7x + pipeline overlap).
        tm = M
        grid_m = 1
        target_steps = min(N, min_steps)
        nb = max(1, min(N, tile_m // max(M, 1), N // max(target_steps, 1), 64))
        while N % nb:                                          # nb must divide N
            nb -= 1
    else:
        tm = tile_m
        assert tm % 128 == 0, "tile_m must be a multiple of 128 when it tiles H*W"
        grid_m = pl.cdiv(M, tm)                                # tail handled by Pallas
        nb = 1
    grid_n = N // nb

    w_f = jnp.asarray(w, jnp.float32).reshape(C_OUT, C_IN)     # (6, 32)
    b_col = jnp.asarray(b, jnp.float32).reshape(C_OUT, 1)      # (6, 1)
    scope = float(scope)
    # post-sigmoid affine: score -> s ; loc -> s*scope ; angle -> s*pi/2 - pi/4
    scale = jnp.array([1.0, scope, scope, scope, scope, _HALF_PI],
                      jnp.float32).reshape(C_OUT, 1)
    offset = jnp.array([0.0, 0.0, 0.0, 0.0, 0.0, -0.5 * _HALF_PI],
                       jnp.float32).reshape(C_OUT, 1)

    cost = pl.CostEstimate(
        flops=2 * C_OUT * C_IN * N * M,
        transcendentals=C_OUT * N * M,
        bytes_accessed=4 * N * M * (C_IN + C_OUT) + 4 * C_OUT * (C_IN + 3),
    )

    score, geo = pl.pallas_call(
        _make_output_kernel(nb),
        out_shape=(
            jax.ShapeDtypeStruct((N, 1, M), jnp.float32),
            jax.ShapeDtypeStruct((N, 5, M), jnp.float32),
        ),
        grid_spec=pltpu.PrefetchScalarGridSpec(
            num_scalar_prefetch=0,
            grid=(grid_n, grid_m),
            in_specs=[
                pl.BlockSpec((nb, C_IN, tm), lambda n, m: (n, 0, m)),   # x tile
                pl.BlockSpec((C_OUT, C_IN), lambda n, m: (0, 0)),       # weights
                pl.BlockSpec((C_OUT, 1), lambda n, m: (0, 0)),          # bias
                pl.BlockSpec((C_OUT, 1), lambda n, m: (0, 0)),          # scale
                pl.BlockSpec((C_OUT, 1), lambda n, m: (0, 0)),          # offset
            ],
            out_specs=[
                pl.BlockSpec((nb, 1, tm), lambda n, m: (n, 0, m)),      # score
                pl.BlockSpec((nb, 5, tm), lambda n, m: (n, 0, m)),      # geo
            ],
        ),
        compiler_params=pltpu.CompilerParams(
            dimension_semantics=("parallel", "parallel")),
        cost_estimate=cost,
    )(x, w_f, b_col, scale, offset)

    return score.reshape(N, 1, H, W), geo.reshape(N, 5, H, W)


def init_params(key):
    """Deterministic kaiming_normal_(mode='fan_out', nonlinearity='relu'),
    fused across the three 1x1 convs (out channels: 1 + 4 + 1 = 6), zero bias."""
    k1, k2, k3 = jax.random.split(key, 3)
    # fan_out of a 1x1 conv = out_channels; gain for relu = sqrt(2)
    w1 = jax.random.normal(k1, (1, C_IN), jnp.float32) * math.sqrt(2.0 / 1.0)
    w2 = jax.random.normal(k2, (4, C_IN), jnp.float32) * math.sqrt(2.0 / 4.0)
    w3 = jax.random.normal(k3, (1, C_IN), jnp.float32) * math.sqrt(2.0 / 1.0)
    w = jnp.concatenate([w1, w2, w3], axis=0)                  # (6, 32)
    b = jnp.zeros((C_OUT,), jnp.float32)
    return w, b


def _reference(x, w, b, scope=SCOPE):
    # pure-JAX reference of the PyTorch forward (1x1 conv == einsum over C)
    y = jnp.einsum("nchw,oc->nohw", x, w) + b[None, :, None, None]
    s = jax.nn.sigmoid(y)
    score = s[:, 0:1]
    loc = s[:, 1:5] * scope
    angle = (s[:, 5:6] - 0.5) * math.pi / 2.0
    return score, jnp.concatenate([loc, angle], axis=1)


if __name__ == "__main__":
    key = jax.random.PRNGKey(0)
    kx, kp = jax.random.split(key)
    N, H, W = 2, 16, 16
    x = jax.random.normal(kx, (N, C_IN, H, W), jnp.float32)
    w, b = init_params(kp)

    score, geo = output_forward(x, w, b)
    score, geo = jax.block_until_ready((score, geo))

    score_ref, geo_ref = _reference(x, w, b)
    assert score.shape == (N, 1, H, W) and geo.shape == (N, 5, H, W)
    # approx-reciprocal sigmoid -> slightly looser tolerances (loc is scaled by 512)
    assert jnp.allclose(score, score_ref, atol=1e-3, rtol=1e-2)
    assert jnp.allclose(geo, geo_ref, atol=1e-2, rtol=1e-2)
    print("KERNEL_OK")
</pallas_src>

<mosaic_0001>
module attributes {stable_mosaic.version = 11 : i64} {
  func.func @kernel(%arg0: i32, %arg1: i32, %arg2: memref<1x32x256xf32, #tpu.memory_space<vmem>>, %arg3: memref<6x32xf32, #tpu.memory_space<vmem>>, %arg4: memref<6x1xf32, #tpu.memory_space<vmem>>, %arg5: memref<6x1xf32, #tpu.memory_space<vmem>>, %arg6: memref<6x1xf32, #tpu.memory_space<vmem>>, %arg7: memref<1x1x256xf32, #tpu.memory_space<vmem>>, %arg8: memref<1x5x256xf32, #tpu.memory_space<vmem>>) attributes {dimension_semantics = [#tpu.dimension_semantics<parallel>, #tpu.dimension_semantics<parallel>], iteration_bounds = array<i64: 2, 1>, scalar_prefetch = 0 : i64, scratch_operands = 0 : i64, tpu.core_type = #tpu.core_type<tc>, window_params = [{transform_indices = @transform_0, window_bounds = array<i64: 1, 32, 256>}, {pipeline_mode = #tpu.pipeline_mode<synchronous>, transform_indices = @transform_1, window_bounds = array<i64: 6, 32>}, {pipeline_mode = #tpu.pipeline_mode<synchronous>, transform_indices = @transform_2, window_bounds = array<i64: 6, 1>}, {pipeline_mode = #tpu.pipeline_mode<synchronous>, transform_indices = @transform_3, window_bounds = array<i64: 6, 1>}, {pipeline_mode = #tpu.pipeline_mode<synchronous>, transform_indices = @transform_4, window_bounds = array<i64: 6, 1>}, {transform_indices = @transform_5, window_bounds = array<i64: 1, 1, 256>}, {transform_indices = @transform_6, window_bounds = array<i64: 1, 5, 256>}]} {
    %c0 = arith.constant 0 : index
    %c0_0 = arith.constant 0 : index
    %0 = vector.load %arg3[%c0, %c0_0] : memref<6x32xf32, #tpu.memory_space<vmem>>, vector<6x32xf32>
    %c0_1 = arith.constant 0 : index
    %c0_2 = arith.constant 0 : index
    %1 = vector.load %arg4[%c0_1, %c0_2] : memref<6x1xf32, #tpu.memory_space<vmem>>, vector<6x1xf32>
    %c0_3 = arith.constant 0 : index
    %c0_4 = arith.constant 0 : index
    %2 = vector.load %arg5[%c0_3, %c0_4] : memref<6x1xf32, #tpu.memory_space<vmem>>, vector<6x1xf32>
    %c0_5 = arith.constant 0 : index
    %c0_6 = arith.constant 0 : index
    %3 = vector.load %arg6[%c0_5, %c0_6] : memref<6x1xf32, #tpu.memory_space<vmem>>, vector<6x1xf32>
    %c0_7 = arith.constant 0 : index
    %c0_8 = arith.constant 0 : index
    %c0_9 = arith.constant 0 : index
    %4 = vector.load %arg2[%c0_7, %c0_8, %c0_9] : memref<1x32x256xf32, #tpu.memory_space<vmem>>, vector<1x32x256xf32>
    %5 = vector.shape_cast %4 : vector<1x32x256xf32> to vector<32x256xf32>
    %cst = arith.constant dense<0.000000e+00> : vector<6x256xf32>
    %6 = tpu.matmul %0, %5, %cst {dimension_numbers = #tpu.dot_dimension_numbers<[1], [0], [0], [1], [0, 0, 1, 1], [], []>} : vector<6x32xf32>, vector<32x256xf32>, vector<6x256xf32> -> vector<6x256xf32>
    %7 = vector.broadcast %1 : vector<6x1xf32> to vector<6x256xf32>
    %8 = arith.addf %6, %7 : vector<6x256xf32>
    %cst_10 = arith.constant 0.000000e+00 : f32
    %9 = vector.broadcast %cst_10 : f32 to vector<6x256xf32>
    %10 = arith.subf %9, %8 : vector<6x256xf32>
    %11 = math.exp %10 : vector<6x256xf32>
    %cst_11 = arith.constant 1.000000e+00 : f32
    %12 = vector.broadcast %cst_11 : f32 to vector<6x256xf32>
    %13 = arith.addf %12, %11 : vector<6x256xf32>
    %14 = tpu.reciprocal %13 {approx = true} : vector<6x256xf32> -> vector<6x256xf32>
    %15 = vector.broadcast %2 : vector<6x1xf32> to vector<6x256xf32>
    %16 = arith.mulf %14, %15 : vector<6x256xf32>
    %17 = vector.broadcast %3 : vector<6x1xf32> to vector<6x256xf32>
    %18 = arith.addf %16, %17 : vector<6x256xf32>
    %19 = vector.extract_strided_slice %18 {offsets = [0, 0], sizes = [1, 256], strides = [1, 1]} : vector<6x256xf32> to vector<1x256xf32>
    %c0_12 = arith.constant 0 : index
    %c0_13 = arith.constant 0 : index
    %c0_14 = arith.constant 0 : index
    %20 = vector.load %arg7[%c0_12, %c0_13, %c0_14] : memref<1x1x256xf32, #tpu.memory_space<vmem>>, vector<1x1x256xf32>
    %21 = vector.shape_cast %20 : vector<1x1x256xf32> to vector<1x256xf32>
    %22 = vector.shape_cast %19 : vector<1x256xf32> to vector<1x1x256xf32>
    tpu.vector_store %arg7[%c0_12, %c0_13, %c0_14], %22 {strides = array<i32>} : memref<1x1x256xf32, #tpu.memory_space<vmem>>, vector<1x1x256xf32>,
    %23 = vector.extract_strided_slice %18 {offsets = [1, 0], sizes = [5, 256], strides = [1, 1]} : vector<6x256xf32> to vector<5x256xf32>
    %c0_15 = arith.constant 0 : index
    %c0_16 = arith.constant 0 : index
    %c0_17 = arith.constant 0 : index
    %24 = vector.load %arg8[%c0_15, %c0_16, %c0_17] : memref<1x5x256xf32, #tpu.memory_space<vmem>>, vector<1x5x256xf32>
    %25 = vector.shape_cast %24 : vector<1x5x256xf32> to vector<5x256xf32>
    %26 = vector.shape_cast %23 : vector<5x256xf32> to vector<1x5x256xf32>
    tpu.vector_store %arg8[%c0_15, %c0_16, %c0_17], %26 {strides = array<i32>} : memref<1x5x256xf32, #tpu.memory_space<vmem>>, vector<1x5x256xf32>,
    return
  }
  func.func @transform_0(%arg0: i32, %arg1: i32) -> (i32, i32, i32) {
    %c0_i32 = arith.constant 0 : i32
    %c0_i32_0 = arith.constant 0 : i32
    return %arg0, %c0_i32, %arg1 : i32, i32, i32
  }
  func.func @transform_1(%arg0: i32, %arg1: i32) -> (i32, i32) {
    %c0_i32 = arith.constant 0 : i32
    %c0_i32_0 = arith.constant 0 : i32
    %c0_i32_1 = arith.constant 0 : i32
    return %c0_i32, %c0_i32_0 : i32, i32
  }
  func.func @transform_2(%arg0: i32, %arg1: i32) -> (i32, i32) {
    %c0_i32 = arith.constant 0 : i32
    %c0_i32_0 = arith.constant 0 : i32
    %c0_i32_1 = arith.constant 0 : i32
    return %c0_i32, %c0_i32_0 : i32, i32
  }
  func.func @transform_3(%arg0: i32, %arg1: i32) -> (i32, i32) {
    %c0_i32 = arith.constant 0 : i32
    %c0_i32_0 = arith.constant 0 : i32
    %c0_i32_1 = arith.constant 0 : i32
    return %c0_i32, %c0_i32_0 : i32, i32
  }
  func.func @transform_4(%arg0: i32, %arg1: i32) -> (i32, i32) {
    %c0_i32 = arith.constant 0 : i32
    %c0_i32_0 = arith.constant 0 : i32
    %c0_i32_1 = arith.constant 0 : i32
    return %c0_i32, %c0_i32_0 : i32, i32
  }
  func.func @transform_5(%arg0: i32, %arg1: i32) -> (i32, i32, i32) {
    %c0_i32 = arith.constant 0 : i32
    %c0_i32_0 = arith.constant 0 : i32
    return %arg0, %c0_i32, %arg1 : i32, i32, i32
  }
  func.func @transform_6(%arg0: i32, %arg1: i32) -> (i32, i32, i32) {
    %c0_i32 = arith.constant 0 : i32
    %c0_i32_0 = arith.constant 0 : i32
    return %arg0, %c0_i32, %arg1 : i32, i32, i32
  }
}

</mosaic_0001>

<llo_original>
// kernel: tpu_custom_call.1
$region0: #{tpu_custom_call.1}
  #allocation0 [shape = 'u32[]', space=smem, size = 0x4, offset = 0x4, fixed_abs, tag = 'smem constant byte address 0x4 - core index']
  #allocation1 [shape = 'u32[144,128]{1,0:T(1,128)}', space=vmem, size = 0x12000, scoped, tag = 'internal scratch']
  %s0 = inlined_call_operand.hbm [shape: f32[2,32,256], index: 0, kind: input, shape index: {}]
  %s1 = inlined_call_operand.vmem [shape: f32[6,32], index: 1, kind: input, shape index: {}]
  %s2 = inlined_call_operand.vmem [shape: f32[6,1], index: 2, kind: input, shape index: {}]
  %s3 = inlined_call_operand.vmem [shape: f32[6,1], index: 3, kind: input, shape index: {}]
  %s4 = inlined_call_operand.vmem [shape: f32[6,1], index: 4, kind: input, shape index: {}]
  %s5 = inlined_call_operand.hbm [shape: f32[2,1,256], index: 5, kind: output, shape index: {0}]
  %s6 = inlined_call_operand.vmem [shape: f32[2,5,256], index: 6, kind: output, shape index: {1}]
  %7 = xla_tuple %s5, %s6
  %s8 = sld [smem:[#allocation0]]
  $region65: #{tpu_custom_call.1} parent=0
    _
  %s10 = ssub.s32 1, %s8
  %s11 = scalar_select 0, %s10, %s8
  $region1: #{tpu_custom_call.1} parent=0
    #allocation2 [shape = 'u8[65536]{0}', space=vmem, size = 0x10000, scoped, tag = 'input window, operand 0']
    #allocation3 [shape = 's32[2]{0}', space=sflag, size = 0x8, scoped, tag = 'scoped memory for tpu_custom_call.1']
    #allocation4 [shape = 's32[2]{0}', space=sflag, size = 0x8, scoped, tag = 'scoped memory for tpu_custom_call.1']
    #allocation5 [shape = 'u8[2048]{0}', space=vmem, size = 0x800, scoped, tag = 'output window, operand 0']
    %12 = vsyncpa [#allocation3], 0
    %s13 = scalar_lea.sflag [#allocation3], 1
    %14 = vsyncpa %s13, 0
    %15 = vsyncpa [#allocation4], 0
    %s16 = scalar_lea.sflag [#allocation4], 1
    %17 = vsyncpa %s16, 0
    loop: start=0, step=1, limit=4
    $region2: #{tpu_custom_call.1} parent=1 // loop_pre_header
      _
    $region3: #{tpu_custom_call.1} parent=1 // loop_header
      %s19 = sphi 0, %s23
      %p20 = scmp.ge.s32.totalorder %s19, 4
      %s26 = sphi 0, %s38
      %s27 = sphi 0, %s34
      %s28 = sphi 0, %s26
      %s29 = sphi 0, %s27
      %s30 = sphi 0, %s28
      %s31 = sphi 0, %s29
      %s43 = sphi 0, %s45
      %s46 = sphi 0, %s43
      %s47 = sphi 0, %s46
      %s63 = sphi 0, %s47
      %s67 = sphi 0, %s67
      %s69 = sphi 0, %s67
      %s70 = sphi 0, %s69
      %s84 = sphi 0, %s70
      %s88 = sphi 0, %s88
      %s90 = sphi 0, %s88
      %s91 = sphi 0, %s90
      %s105 = sphi 0, %s91
      %s109 = sphi 0, %s109
      %s111 = sphi 0, %s109
      %s112 = sphi 0, %s111
      %s126 = sphi 0, %s112
      %s130 = sphi 0, %s130
      %s132 = sphi 0, %s130
      %s133 = sphi 0, %s132
      %s147 = sphi 0, %s133
      %s155 = sphi 0, %s157
      %s158 = sphi 0, %s155
      %s159 = sphi 0, %s158
      %s175 = sphi 0, %s159
      %s183 = sphi 0, %s185
      %s186 = sphi 0, %s183
      %s187 = sphi 0, %s186
      %s203 = sphi 0, %s187
    $region4: #{tpu_custom_call.1} parent=1 // loop_header_branch
      %22 = sbr.rel (%p20) target = $region8
    $region5: #{tpu_custom_call.1} parent=1 // loop_body
      %s24 = ssub.s32 %s19, 1
      %s25 = ssub.s32 %s19, 2
      %s32 = sadd.s32 1, %s27
      %p33 = scmp.ge.s32.totalorder %s32, 1
      %s34 = scalar_select %p33, 0, %s32
      %s35 = sadd.s32 1, %s26
      %s36 = scalar_select %p33, %s35, %s26
      %p37 = scmp.ge.s32.totalorder %s36, 2
      %s38 = scalar_select %p37, 0, %s36
      %s39 = ssub.s32 %s26, %s38
      %s40 = ssub.s32 %s27, %s34
      %s41 = sor.u32 %s39, %s40
      %p42 = scmp.eq.s32.totalorder %s41, 0
      %s44 = sadd.s32 %s43, 1
      %s45 = scalar_select %p42, %s43, %s44
      %p48 = pneg %p42
      %p49 = scmp.eq.s32.totalorder %s19, 1
      %p50 = por %p48, %p49
      %p51 = scmp.ne.s32.totalorder %s43, %s46
      %p52 = scmp.eq.s32.totalorder %s19, 0
      %p53 = por %p51, %p52
      %p54 = scmp.ne.s32.totalorder %s43, %s46
      %p55 = scmp.eq.s32.totalorder %s24, 1
      %p56 = por %p54, %p55
      %p57 = scmp.ne.s32.totalorder %s46, %s47
      %p58 = scmp.eq.s32.totalorder %s24, 0
      %p59 = por %p57, %p58
      %p60 = scmp.ne.s32.totalorder %s46, %s47
      %p61 = scmp.eq.s32.totalorder %s25, 1
      %p62 = por %p60, %p61
      %p64 = scmp.ne.s32.totalorder %s47, %s63
      %p65 = scmp.eq.s32.totalorder %s25, 0
      %p66 = por %p64, %p65
      %s68 = sadd.s32 %s67, 1
      %p71 = scmp.eq.s32.totalorder %s19, 1
      %p72 = scmp.ne.s32.totalorder %s67, %s69
      %p73 = scmp.eq.s32.totalorder %s19, 0
      %p74 = por %p72, %p73
      %p75 = scmp.ne.s32.totalorder %s67, %s69
      %p76 = scmp.eq.s32.totalorder %s24, 1
      %p77 = por %p75, %p76
      %p78 = scmp.ne.s32.totalorder %s69, %s70
      %p79 = scmp.eq.s32.totalorder %s24, 0
      %p80 = por %p78, %p79
      %p81 = scmp.ne.s32.totalorder %s69, %s70
      %p82 = scmp.eq.s32.totalorder %s25, 1
      %p83 = por %p81, %p82
      %p85 = scmp.ne.s32.totalorder %s70, %s84
      %p86 = scmp.eq.s32.totalorder %s25, 0
      %p87 = por %p85, %p86
      %s89 = sadd.s32 %s88, 1
      %p92 = scmp.eq.s32.totalorder %s19, 1
      %p93 = scmp.ne.s32.totalorder %s88, %s90
      %p94 = scmp.eq.s32.totalorder %s19, 0
      %p95 = por %p93, %p94
      %p96 = scmp.ne.s32.totalorder %s88, %s90
      %p97 = scmp.eq.s32.totalorder %s24, 1
      %p98 = por %p96, %p97
      %p99 = scmp.ne.s32.totalorder %s90, %s91
      %p100 = scmp.eq.s32.totalorder %s24, 0
      %p101 = por %p99, %p100
      %p102 = scmp.ne.s32.totalorder %s90, %s91
      %p103 = scmp.eq.s32.totalorder %s25, 1
      %p104 = por %p102, %p103
      %p106 = scmp.ne.s32.totalorder %s91, %s105
      %p107 = scmp.eq.s32.totalorder %s25, 0
      %p108 = por %p106, %p107
      %s110 = sadd.s32 %s109, 1
      %p113 = scmp.eq.s32.totalorder %s19, 1
      %p114 = scmp.ne.s32.totalorder %s109, %s111
      %p115 = scmp.eq.s32.totalorder %s19, 0
      %p116 = por %p114, %p115
      %p117 = scmp.ne.s32.totalorder %s109, %s111
      %p118 = scmp.eq.s32.totalorder %s24, 1
      %p119 = por %p117, %p118
      %p120 = scmp.ne.s32.totalorder %s111, %s112
      %p121 = scmp.eq.s32.totalorder %s24, 0
      %p122 = por %p120, %p121
      %p123 = scmp.ne.s32.totalorder %s111, %s112
      %p124 = scmp.eq.s32.totalorder %s25, 1
      %p125 = por %p123, %p124
      %p127 = scmp.ne.s32.totalorder %s112, %s126
      %p128 = scmp.eq.s32.totalorder %s25, 0
      %p129 = por %p127, %p128
      %s131 = sadd.s32 %s130, 1
      %p134 = scmp.eq.s32.totalorder %s19, 1
      %p135 = scmp.ne.s32.totalorder %s130, %s132
      %p136 = scmp.eq.s32.totalorder %s19, 0
      %p137 = por %p135, %p136
      %p138 = scmp.ne.s32.totalorder %s130, %s132
      %p139 = scmp.eq.s32.totalorder %s24, 1
      %p140 = por %p138, %p139
      %p141 = scmp.ne.s32.totalorder %s132, %s133
      %p142 = scmp.eq.s32.totalorder %s24, 0
      %p143 = por %p141, %p142
      %p144 = scmp.ne.s32.totalorder %s132, %s133
      %p145 = scmp.eq.s32.totalorder %s25, 1
      %p146 = por %p144, %p145
      %p148 = scmp.ne.s32.totalorder %s133, %s147
      %p149 = scmp.eq.s32.totalorder %s25, 0
      %p150 = por %p148, %p149
      %s151 = ssub.s32 %s26, %s38
      %s152 = ssub.s32 %s27, %s34
      %s153 = sor.u32 %s151, %s152
      %p154 = scmp.eq.s32.totalorder %s153, 0
      %s156 = sadd.s32 %s155, 1
      %s157 = scalar_select %p154, %s155, %s156
      %p160 = pneg %p154
      %p161 = scmp.eq.s32.totalorder %s19, 1
      %p162 = por %p160, %p161
      %p163 = scmp.ne.s32.totalorder %s155, %s158
      %p164 = scmp.eq.s32.totalorder %s19, 0
      %p165 = por %p163, %p164
      %p166 = scmp.ne.s32.totalorder %s155, %s158
      %p167 = scmp.eq.s32.totalorder %s24, 1
      %p168 = por %p166, %p167
      %p169 = scmp.ne.s32.totalorder %s158, %s159
      %p170 = scmp.eq.s32.totalorder %s24, 0
      %p171 = por %p169, %p170
      %p172 = scmp.ne.s32.totalorder %s158, %s159
      %p173 = scmp.eq.s32.totalorder %s25, 1
      %p174 = por %p172, %p173
      %p176 = scmp.ne.s32.totalorder %s159, %s175
      %p177 = scmp.eq.s32.totalorder %s25, 0
      %p178 = por %p176, %p177
      %s179 = ssub.s32 %s26, %s38
      %s180 = ssub.s32 %s27, %s34
      %s181 = sor.u32 %s179, %s180
      %p182 = scmp.eq.s32.totalorder %s181, 0
      %s184 = sadd.s32 %s183, 1
      %s185 = scalar_select %p182, %s183, %s184
      %p188 = pneg %p182
      %p189 = scmp.eq.s32.totalorder %s19, 1
      %p190 = por %p188, %p189
      %p191 = scmp.ne.s32.totalorder %s183, %s186
      %p192 = scmp.eq.s32.totalorder %s19, 0
      %p193 = por %p191, %p192
      %p194 = scmp.ne.s32.totalorder %s183, %s186
      %p195 = scmp.eq.s32.totalorder %s24, 1
      %p196 = por %p194, %p195
      %p197 = scmp.ne.s32.totalorder %s186, %s187
      %p198 = scmp.eq.s32.totalorder %s24, 0
      %p199 = por %p197, %p198
      %p200 = scmp.ne.s32.totalorder %s186, %s187
      %p201 = scmp.eq.s32.totalorder %s25, 1
      %p202 = por %p200, %p201
      %p204 = scmp.ne.s32.totalorder %s187, %s203
      %p205 = scmp.eq.s32.totalorder %s25, 0
      %p206 = por %p204, %p205
      %p207 = scmp.le.s32.totalorder 1, %s19
      %p208 = scmp.lt.s32.totalorder %s19, 3
      %p209 = pnand %p207, %p208
      %p210 = pneg %p209
      // Predicated region
      $region9: #{tpu_custom_call.1} parent=5 // pred_check
        _
      $region10: #{tpu_custom_call.1} parent=5 // pred_check_branch
        %212 = sbr.rel (%p209) target = $region12
      $region11: #{tpu_custom_call.1} parent=5 // pred_region
        %s213 = ssub.s32 %s19, 1
        // Predicated region
        $region13: #{tpu_custom_call.1} parent=11 // pred_check
          %p214 = pneg %p80
        $region14: #{tpu_custom_call.1} parent=11 // pred_check_branch
          %216 = sbr.rel (%p214) target = $region16
        $region15: #{tpu_custom_call.1} parent=11 // pred_region
          _
        $region16: #{tpu_custom_call.1} parent=11 // pred_fallthru
          _
        // Predicated region
        $region17: #{tpu_custom_call.1} parent=11 // pred_check
          %p217 = pneg %p101
        $region18: #{tpu_custom_call.1} parent=11 // pred_check_branch
          %219 = sbr.rel (%p217) target = $region20
        $region19: #{tpu_custom_call.1} parent=11 // pred_region
          _
        $region20: #{tpu_custom_call.1} parent=11 // pred_fallthru
          _
        // Predicated region
        $region21: #{tpu_custom_call.1} parent=11 // pred_check
          %p220 = pneg %p122
        $region22: #{tpu_custom_call.1} parent=11 // pred_check_branch
          %222 = sbr.rel (%p220) target = $region24
        $region23: #{tpu_custom_call.1} parent=11 // pred_region
          _
        $region24: #{tpu_custom_call.1} parent=11 // pred_fallthru
          _
        // Predicated region
        $region25: #{tpu_custom_call.1} parent=11 // pred_check
          %p223 = pneg %p143
        $region26: #{tpu_custom_call.1} parent=11 // pred_check_branch
          %225 = sbr.rel (%p223) target = $region28
        $region27: #{tpu_custom_call.1} parent=11 // pred_region
          _
        $region28: #{tpu_custom_call.1} parent=11 // pred_fallthru
          _
      $region12: #{tpu_custom_call.1} parent=5 // pred_fallthru
        _
      %p226 = scmp.lt.s32.totalorder %s19, 2
      // Predicated region
      $region29: #{tpu_custom_call.1} parent=5 // pred_check
        %p227 = pneg %p226
      $region30: #{tpu_custom_call.1} parent=5 // pred_check_branch
        %229 = sbr.rel (%p227) target = $region32
      $region31: #{tpu_custom_call.1} parent=5 // pred_region
        // Predicated region
        $region33: #{tpu_custom_call.1} parent=31 // pred_check
          %p230 = pneg %p53
        $region34: #{tpu_custom_call.1} parent=31 // pred_check_branch
          %232 = sbr.rel (%p230) target = $region36
        $region35: #{tpu_custom_call.1} parent=31 // pred_region
          %s233 = sand.u32 %s43, 1
          %s234 = scalar_lea.sflag [#allocation3], %s233
          %s235 = sand.u32 %s43, 1
          %s236 = smul.addr %s235, 64
          %s237 = scalar_lea.vmem [#allocation2], %s236
          %s238 = smul.u32 2, %s27
          %s240 = ssub.s32 1024, 1024
          %241 = vsyncadd %s234, %s240
          %s242 = smul.addr %s26, 8
          %s243 = sadd.s32 %s238, %s242
          %s244 = smul.addr %s243, 128
          %s245 = scalar_lea.hbm %s0, %s244
          %s246 = sshll.u32 %s237, 4
          %s247 = int_to_ptr.vmem [resolvable:$true] %s246
          %252 = dma.hbm_to_vmem [thread:$0]  %s245, 1024, %s247, %s234, 256, 256, 16
        $region36: #{tpu_custom_call.1} parent=31 // pred_fallthru
          _
      $region32: #{tpu_custom_call.1} parent=5 // pred_fallthru
        _
      %p253 = scmp.le.s32.totalorder 1, %s19
      %p254 = scmp.lt.s32.totalorder %s19, 3
      %p255 = pnand %p253, %p254
      %p256 = pneg %p255
      // Predicated region
      $region37: #{tpu_custom_call.1} parent=5 // pred_check
        _
      $region38: #{tpu_custom_call.1} parent=5 // pred_check_branch
        %258 = sbr.rel (%p255) target = $region40
      $region39: #{tpu_custom_call.1} parent=5 // pred_region
        %s259 = ssub.s32 %s19, 1
        %s260 = sand.u32 %s46, 1
        %s261 = scalar_lea.sflag [#allocation3], %s260
        %s262 = sand.u32 %s46, 1
        %s263 = smul.addr %s262, 64
        %s264 = scalar_lea.vmem [#allocation2], %s263
        // Predicated region
        $region41: #{tpu_custom_call.1} parent=39 // pred_check
          %p265 = pneg %p59
        $region42: #{tpu_custom_call.1} parent=39 // pred_check_branch
          %267 = sbr.rel (%p265) target = $region44
        $region43: #{tpu_custom_call.1} parent=39 // pred_region
          %268 = dma.done %s261, 1024
        $region44: #{tpu_custom_call.1} parent=39 // pred_fallthru
          _
        %s269 = sand.u32 %s46, 1
        %s270 = scalar_lea.sflag [#allocation3], %s269
        %s271 = sand.u32 %s46, 1
        %s272 = smul.addr %s271, 64
        %s273 = scalar_lea.vmem [#allocation2], %s272
        %p274 = pneg %p59
        %p275 = pneg %p56
        %p276 = pneg %p80
        %p277 = pneg %p77
        %p278 = pneg %p101
        %p279 = pneg %p98
        %p280 = pneg %p122
        %p281 = pneg %p119
        %p282 = pneg %p143
        %p283 = pneg %p140
        %p284 = pneg %p171
        %p285 = pneg %p168
        %s286 = sand.u32 %s158, 1
        %s287 = scalar_lea.sflag [#allocation4], %s286
        %s288 = sand.u32 %s158, 1
        %s289 = smul.addr %s288, 2
        %s290 = scalar_lea.vmem [#allocation5], %s289
        %p291 = pneg %p199
        %p292 = pneg %p196
        %s293 = smul.u32 2, %s29
        %p294 = scmp.lt.s32.totalorder %s28, 1
        %s295 = scalar_select %p294, %s28, 1
        %p296 = scmp.lt.s32.totalorder %s293, 1
        %s297 = scalar_select %p296, %s293, 1
        %s298 = smul.addr %s295, 2
        %s299 = sadd.s32 %s297, %s298
        %s300 = smul.addr %s299, 8
        %s301 = scalar_lea.vmem %s6, %s300
        %s302 = smul.u32 2, %s29
        %s303 = smul.u32 2, %s29
        %s304 = smul.u32 2, %s29
        %p305 = scmp.lt.s32.totalorder %s28, 1
        %s306 = scalar_select %p305, %s28, 1
        %p307 = scmp.lt.s32.totalorder %s304, 1
        %s308 = scalar_select %p307, %s304, 1
        %s309 = smul.addr %s306, 2
        %s310 = sadd.s32 %s308, %s309
        %s311 = smul.addr %s310, 8
        %s312 = scalar_lea.vmem %s6, %s311
        %s313 = smul.u32 2, %s29
        %v314 = vld [vmem:[%s1] sm:$0x3f]
        %v315 = vld [vmem:[%s2] sm:$0x3f]
        %v316 = vld [vmem:[%s3] sm:$0x3f]
        %v317 = vld [vmem:[%s4] sm:$0x3f]
        %v318 = vld [vmem:[%s264] sm:$0xff]
        %v319 = vld [vmem:[%s264 + $0x8] sm:$0xff]
        %v320 = vld [vmem:[%s264 + $0x10] sm:$0xff]
        %v321 = vld [vmem:[%s264 + $0x18] sm:$0xff]
        %v322 = vld [vmem:[%s264 + $0x20] sm:$0xff]
        %v323 = vld [vmem:[%s264 + $0x28] sm:$0xff]
        %v324 = vld [vmem:[%s264 + $0x30] sm:$0xff]
        %v325 = vld [vmem:[%s264 + $0x38] sm:$0xff]
        %327 = vset.pattern.permute.xlu0 0
        %328 = vperm.xlu0 %327, %v315
        %v329 = vpop.permute.xlu0 %328
        %vm331 = vcmask 261120
        %v333 = vsel %vm331, %v314, 0
        %335 = vmatprep.subr.mxu0 %v319
        %336 = vmatpush1.msra.mxu0 %v318
        %337 = vmatprep.subr.mxu0 %v321
        %338 = vmatpush1.msra.mxu0 %v320
        %339 = vmatprep.subr.mxu0 %v323
        %340 = vmatpush1.msra.mxu0 %v322
        %341 = vmatprep.subr.mxu0 %v325
        %342 = vmatpush1.msra.mxu0 %v324
        %343 = vmatprep.subr.mxu0 0.0
        %344 = vmatpush1.msra.mxu0 0.0
        %345 = vmatprep.subr.mxu0 0.0
        %346 = vmatpush1.msra.mxu0 0.0
        %347 = vmatprep.subr.mxu0 0.0
        %348 = vmatpush1.msra.mxu0 0.0
        %349 = vmatprep.subr.mxu0 0.0
        %350 = vmatpush1.msra.mxu0 0.0
        %351 = vmatprep.subr.mxu0 0.0
        %352 = vmatpush1.msra.mxu0 0.0
        %353 = vmatprep.subr.mxu0 0.0
        %354 = vmatpush1.msra.mxu0 0.0
        %355 = vmatprep.subr.mxu0 0.0
        %356 = vmatpush1.msra.mxu0 0.0
        %357 = vmatprep.subr.mxu0 0.0
        %358 = vmatpush1.msra.mxu0 0.0
        %359 = vmatprep.subr.mxu0 0.0
        %360 = vmatpush1.msra.mxu0 0.0
        %361 = vmatprep.subr.mxu0 0.0
        %362 = vmatpush1.msra.mxu0 0.0
        %363 = vmatprep.subr.mxu0 0.0
        %364 = vmatpush1.msra.mxu0 0.0
        %365 = vmatprep.subr.mxu0 0.0
        %366 = vmatpush1.msra.mxu0 0.0
        %367 = vmatprep.subr.mxu0 0.0
        %368 = vmatpush1.msra.mxu0 0.0
        %369 = vmatprep.subr.mxu0 0.0
        %370 = vmatpush1.msra.mxu0 0.0
        %371 = vmatprep.subr.mxu0 0.0
        %372 = vmatpush1.msra.mxu0 0.0
        %373 = vmatprep.subr.mxu0 0.0
        %374 = vmatpush1.msra.mxu0 0.0
        %375 = vmatprep.subr.mxu0 0.0
        %376 = vmatpush1.msra.mxu0 0.0
        %377 = vmatprep.subr.mxu0 0.0
        %378 = vmatpush1.msra.mxu0 0.0
        %379 = vmatprep.subr.mxu0 0.0
        %380 = vmatpush1.msra.mxu0 0.0
        %381 = vmatprep.subr.mxu0 0.0
        %382 = vmatpush1.msra.mxu0 0.0
        %383 = vmatprep.subr.mxu0 0.0
        %384 = vmatpush1.msra.mxu0 0.0
        %385 = vmatprep.subr.mxu0 0.0
        %386 = vmatpush1.msra.mxu0 0.0
        %387 = vmatprep.subr.mxu0 0.0
        %388 = vmatpush1.msra.mxu0 0.0
        %389 = vmatprep.subr.mxu0 0.0
        %390 = vmatpush1.msra.mxu0 0.0
        %391 = vmatprep.subr.mxu0 0.0
        %392 = vmatpush1.msra.mxu0 0.0
        %393 = vmatprep.subr.mxu0 0.0
        %394 = vmatpush1.msra.mxu0 0.0
        %395 = vmatprep.subr.mxu0 0.0
        %396 = vmatpush1.msra.mxu0 0.0
        %397 = vmatprep.subr.mxu0 0.0
        %398 = vmatpush1.msra.mxu0 0.0
        %399 = vmatprep.mubr.f32.mxu0 0.0
        %400 = vmatmul.mubr.f32.gmra.mrb[0].mxu0 %v333
        %v401 = vpop.f32.mrb[0].mxu0
        %v402 = vadd.f32 %v329, %v401
        %v403 = vpop.f32.mrb[0].mxu0
        %v404 = vadd.f32 %v329, %v403
        %405 = vdwg.mxu0
        %v406 = vsub.f32 0.0, %v402
        %v407 = vsub.f32 0.0, %v404
        %v408 = vmul.f32 %v406, 1.442695
        %v409 = vpow.pop %v408
        %v410 = vmul.f32 %v407, 1.442695
        %v411 = vpow.pop %v410
        %v412 = vadd.f32 %v409, 1.0
        %v413 = vadd.f32 %v411, 1.0
        %v414 = vrcp.pop %v412
        %v415 = vrcp.pop %v413
        %417 = vset.pattern.permute.xlu0 0
        %418 = vperm.xlu0 %417, %v316
        %v419 = vpop.permute.xlu0 %418
        %v421 = vmul.f32 %v414, %v419
        %v422 = vmul.f32 %v415, %v419
        %424 = vset.pattern.permute.xlu0 0
        %425 = vperm.xlu0 %424, %v317
        %v426 = vpop.permute.xlu0 %425
        %v428 = vadd.f32 %v421, %v426
        %v429 = vadd.f32 %v422, %v426
        %v432 = vcombine.low %v428, %v429
        %v434 = vunpack.c.l.s4 1966171168
        %v435 = vunpack.c.0.s8 %v434
        %v436 = vlaneseq
        %v437 = vshrl.u32 %v436, 7
        %v438 = vsub.s32 %v435, %v437
        %v439 = vrot.slane %v432, %v438
        %v441 = vunpack.c.l.s4 1966171168
        %v442 = vunpack.c.0.s8 %v441
        %v443 = vlaneseq
        %v444 = vshrl.u32 %v443, 7
        %v445 = vsub.s32 %v442, %v444
        %v446 = vrot.slane %v439, %v445
        %v448 = vlaneseq
        %vm449 = vcmp.ge.s32.totalorder %v448, 0
        %vm450 = vcmp.lt.s32.totalorder %v448, 256
        %vm451 = vmand %vm449, %vm450
        %452 = vst.msk [vmem:[%s290] sm:$0x3] %vm451, %v446
        %v453 = vrot.slane %v428, 1
        %v454 = vrot.slane %v429, 1
        %457 = vst [vmem:[%s312] sm:$0x1f] %v453
        %458 = vst [vmem:[%s312 + $0x8] sm:$0x1f] %v454
        %s459 = sand.u32 %s158, 1
        %s460 = scalar_lea.sflag [#allocation4], %s459
        %s461 = sand.u32 %s158, 1
        %s462 = smul.addr %s461, 2
        %s463 = scalar_lea.vmem [#allocation5], %s462
        %s464 = smul.u32 2, %s29
        %p465 = scmp.lt.s32.totalorder %s28, 1
        %s466 = scalar_select %p465, %s28, 1
        %p467 = scmp.lt.s32.totalorder %s464, 1
        %s468 = scalar_select %p467, %s464, 1
        %s469 = smul.addr %s466, 2
        %s470 = sadd.s32 %s468, %s469
        %s471 = smul.addr %s470, 8
        %s472 = scalar_lea.vmem %s6, %s471
        // Predicated region
        $region45: #{tpu_custom_call.1} parent=39 // pred_check
          %p473 = pneg %p168
        $region46: #{tpu_custom_call.1} parent=39 // pred_check_branch
          %475 = sbr.rel (%p473) target = $region48
        $region47: #{tpu_custom_call.1} parent=39 // pred_region
          %s476 = smul.u32 2, %s29
          %s478 = ssub.s32 32, 32
          %479 = vsyncadd %s460, %s478
          %s480 = smul.addr %s28, 2
          %s481 = sadd.s32 %s476, %s480
          %s482 = smul.addr %s481, 16
          %s483 = scalar_lea.hbm %s5, %s482
          %s485 = sshll.u32 %s463, 4
          %s486 = int_to_ptr.vmem [resolvable:$true] %s485
          %488 = dma.vmem_to_hbm [thread:$0]  %s486, 32, %s483, %s460
        $region48: #{tpu_custom_call.1} parent=39 // pred_fallthru
          _
        // Predicated region
        $region49: #{tpu_custom_call.1} parent=39 // pred_check
          %p489 = pneg %p196
        $region50: #{tpu_custom_call.1} parent=39 // pred_check_branch
          %491 = sbr.rel (%p489) target = $region52
        $region51: #{tpu_custom_call.1} parent=39 // pred_region
          %s492 = smul.u32 2, %s29
        $region52: #{tpu_custom_call.1} parent=39 // pred_fallthru
          _
      $region40: #{tpu_custom_call.1} parent=5 // pred_fallthru
        _
      %p493 = scmp.le.s32.totalorder 2, %s19
      // Predicated region
      $region53: #{tpu_custom_call.1} parent=5 // pred_check
        %p494 = pneg %p493
      $region54: #{tpu_custom_call.1} parent=5 // pred_check_branch
        %496 = sbr.rel (%p494) target = $region56
      $region55: #{tpu_custom_call.1} parent=5 // pred_region
        %s497 = ssub.s32 %s19, 2
        // Predicated region
        $region57: #{tpu_custom_call.1} parent=55 // pred_check
          %p498 = pneg %p174
        $region58: #{tpu_custom_call.1} parent=55 // pred_check_branch
          %500 = sbr.rel (%p498) target = $region60
        $region59: #{tpu_custom_call.1} parent=55 // pred_region
          %s501 = sand.u32 %s159, 1
          %s502 = scalar_lea.sflag [#allocation4], %s501
          %s503 = sand.u32 %s159, 1
          %s504 = smul.addr %s503, 2
          %s505 = scalar_lea.vmem [#allocation5], %s504
          %506 = dma.done %s502, 32
        $region60: #{tpu_custom_call.1} parent=55 // pred_fallthru
          _
        // Predicated region
        $region61: #{tpu_custom_call.1} parent=55 // pred_check
          %p507 = pneg %p202
        $region62: #{tpu_custom_call.1} parent=55 // pred_check_branch
          %509 = sbr.rel (%p507) target = $region64
        $region63: #{tpu_custom_call.1} parent=55 // pred_region
          %s510 = smul.u32 2, %s31
          %p511 = scmp.lt.s32.totalorder %s30, 1
          %s512 = scalar_select %p511, %s30, 1
          %p513 = scmp.lt.s32.totalorder %s510, 1
          %s514 = scalar_select %p513, %s510, 1
          %s515 = smul.addr %s512, 2
          %s516 = sadd.s32 %s514, %s515
          %s517 = smul.addr %s516, 8
          %s518 = scalar_lea.vmem %s6, %s517
        $region64: #{tpu_custom_call.1} parent=55 // pred_fallthru
          _
      $region56: #{tpu_custom_call.1} parent=5 // pred_fallthru
        _
    $region6: #{tpu_custom_call.1} parent=1 // loop_footer
      %s23 = sadd.s32 1, %s19
    $region7: #{tpu_custom_call.1} parent=1 // loop_footer_branch
      %18 = sbr.rel target = $region3
    $region8: #{tpu_custom_call.1} parent=1 // loop_exit
      _
    %519 = vsyncpa [#allocation3], 1
    %s520 = scalar_lea.sflag [#allocation3], 1
    %521 = vsyncpa %s520, 1
    %522 = vsyncpa [#allocation4], 1
    %s523 = scalar_lea.sflag [#allocation4], 1
    %524 = vsyncpa %s523, 1

</llo_original>
